<compile_context>
chip_gen: v7x
topology: tpu7x:2x2x1
jax: 0.10.0
libtpu: 0.0.40
codegen_flags: <defaults>
</compile_context>

<pallas_src>
import functools

import jax
import jax.numpy as jnp
import numpy as np
from jax.experimental import pallas as pl
from jax.experimental.pallas import tpu as pltpu


# ----------------------------------------------------------------------------
# capability / generation probes (host-side, best-effort)
# ----------------------------------------------------------------------------
def _check_buffered():
    """Does this JAX build accept BlockSpec(pipeline_mode=pl.Buffered(n))?"""
    try:
        pl.BlockSpec((8, 128), lambda i: (0, 0), pipeline_mode=pl.Buffered(1))
        return True
    except Exception:
        return False


_HAS_BUFFERED = _check_buffered()
_TABLE_NBUF = 1 if _HAS_BUFFERED else 2


def _device_kind():
    try:
        return jax.devices()[0].device_kind.lower()
    except Exception:
        return ""


def _vmem_capacity_bytes():
    """Physical VMEM per core, generation-aware (v7x has 64 MiB, not 128)."""
    try:
        return int(pltpu.get_tpu_info().vmem_capacity_bytes)
    except Exception:
        pass
    kind = _device_kind()
    if "v7" in kind:
        return 64 * 1024 * 1024
    return 128 * 1024 * 1024


def _default_tb():
    """MXU-filling batch tile: 128 on <=v5 (128-wide MXU), 256 on v6e/v7x."""
    kind = _device_kind()
    if any(g in kind for g in ("v2", "v3", "v4", "v5")):
        return 128
    return 256


def _padded_block_bytes(rows, cols, itemsize=4, nbuf=1):
    """Conservative VMEM footprint of a (rows, cols) block under (8,128) tiling."""
    r = -(-rows // 8) * 8
    c = -(-cols // 128) * 128
    return r * c * itemsize * nbuf


# ----------------------------------------------------------------------------
# kernel
# ----------------------------------------------------------------------------
def _mf_kernel(b_idx_ref, s_idx_ref, bt_ref, st_ref, o_ref, *, k_dim):
    """One grid step handles `tb` batch rows (batch on the lane axis).

    b_idx_ref, s_idx_ref : VMEM (1, K*tb) int32  ids, K contiguous tb-lane groups
    bt_ref               : VMEM (F, NB) f32      transposed buyer table (fetched once)
    st_ref               : VMEM (F, NS) f32      transposed seller table (fetched once)
    o_ref                : VMEM (1, tb) f32      per-row dot-product sums (lane-dense)
    """
    bt = bt_ref[...]                       # (F, NB)
    st = st_ref[...]                       # (F, NS)
    b_ids = b_idx_ref[...]                 # (1, K*tb)
    s_ids = s_idx_ref[...]                 # (1, K*tb)

    nb = bt.shape[1]
    ns = st.shape[1]
    ktb = b_ids.shape[1]
    tb = ktb // k_dim

    # One-hot gather matrices: vocab on the sublane axis, batch*K on lanes.
    b_oh = (jax.lax.broadcasted_iota(jnp.int32, (nb, ktb), 0) == b_ids
            ).astype(jnp.float32)          # (NB, K*tb)
    s_oh = (jax.lax.broadcasted_iota(jnp.int32, (ns, ktb), 0) == s_ids
            ).astype(jnp.float32)          # (NS, K*tb)

    # One fused MXU matmul per table covers all K lookups of this tile.
    b_rows = jnp.dot(bt, b_oh, preferred_element_type=jnp.float32)  # (F, K*tb)
    s_rows = jnp.dot(st, s_oh, preferred_element_type=jnp.float32)  # (F, K*tb)
    prod = b_rows * s_rows                                          # (F, K*tb)

    # Combine the K lane groups (static lane slices), then reduce over F.
    acc = prod[:, 0:tb]
    for k in range(1, k_dim):
        acc = acc + prod[:, k * tb:(k + 1) * tb]
    o_ref[...] = jnp.sum(acc, axis=0, keepdims=True)                # (1, tb)


# ----------------------------------------------------------------------------
# wrapper
# ----------------------------------------------------------------------------
def _table_spec(shape, single_buffer):
    if single_buffer:
        # Constant index_map: fetched once for the whole grid; 1 buffer suffices.
        return pl.BlockSpec(shape, lambda i: (0, 0), pipeline_mode=pl.Buffered(1))
    return pl.BlockSpec(shape, lambda i: (0, 0))


@functools.partial(jax.jit,
                   static_argnames=("tb", "vmem_limit", "single_buffer_tables"))
def _mf_forward_impl(b_idx, s_idx, buyer_table, seller_table, *,
                     tb, vmem_limit, single_buffer_tables):
    B, K = b_idx.shape
    NB, F = buyer_table.shape
    NS, _ = seller_table.shape

    num_tiles = pl.cdiv(B, tb)
    b_pad = num_tiles * tb

    # Factors on sublanes, vocabulary on lanes.
    bt_t = buyer_table.astype(jnp.float32).T     # (F, NB)
    st_t = seller_table.astype(jnp.float32).T    # (F, NS)

    def pack(idx):
        # (B, K) -> (1, num_tiles*K*tb); tile i occupies K contiguous tb-lane
        # groups, lane (i*K + k)*tb + j == idx[i*tb + j, k].
        idx = jnp.pad(idx.astype(jnp.int32), ((0, b_pad - B), (0, 0)))
        idx = idx.T.reshape(K, num_tiles, tb).transpose(1, 0, 2)
        return idx.reshape(1, num_tiles * K * tb)

    bi = pack(b_idx)
    si = pack(s_idx)

    kernel = functools.partial(_mf_kernel, k_dim=K)

    out = pl.pallas_call(
        kernel,
        out_shape=jax.ShapeDtypeStruct((1, b_pad), jnp.float32),
        grid_spec=pltpu.PrefetchScalarGridSpec(
            num_scalar_prefetch=0,
            grid=(num_tiles,),
            in_specs=[
                pl.BlockSpec((1, K * tb), lambda i: (0, i)),   # buyer ids tile
                pl.BlockSpec((1, K * tb), lambda i: (0, i)),   # seller ids tile
                _table_spec((F, NB), single_buffer_tables),    # full buyer table
                _table_spec((F, NS), single_buffer_tables),    # full seller table
            ],
            out_specs=pl.BlockSpec((1, tb), lambda i: (0, i)),  # lane-dense row
        ),
        compiler_params=pltpu.CompilerParams(
            dimension_semantics=("parallel",),   # tiles independent -> 2 TCs on v7x
            vmem_limit_bytes=vmem_limit,
        ),
    )(bi, si, bt_t, st_t)

    return out[0, :B]


def matrix_factorization_forward(b_idx, s_idx, buyer_table, seller_table, tb=None):
    """forward(b, s) = (buyer_factors(b) * seller_factors(s)).sum(1).sum(1)."""
    B, K = b_idx.shape
    assert K >= 1, "index arrays must have at least one lookup per row"
    NB, F = buyer_table.shape
    NS, F2 = seller_table.shape
    assert F == F2, "buyer/seller factor dims must match"

    if tb is None:
        tb = _default_tb()

    # Generation-aware VMEM budget (~30% headroom below physical capacity).
    capacity = _vmem_capacity_bytes()
    budget = int(capacity * 0.70)
    est = (
        _padded_block_bytes(F, NB, 4, _TABLE_NBUF)          # buyer table (resident)
        + _padded_block_bytes(F, NS, 4, _TABLE_NBUF)        # seller table (resident)
        + 2 * _padded_block_bytes(1, K * tb, 4, 2)          # id tiles (double-buffered)
        + _padded_block_bytes(1, tb, 4, 2)                  # output tile
        + _padded_block_bytes(NB, K * tb, 4, 1)             # buyer one-hot
        + _padded_block_bytes(NS, K * tb, 4, 1)             # seller one-hot
    )
    vmem_limit = max(est + (2 << 20), 4 << 20)
    if vmem_limit > budget:
        # TODO(synk): HBM-resident tables (memory_space=pl.ANY) + manual DMA
        # row gather for large vocabularies; the one-hot/VMEM-resident path
        # below is only for small tables.
        raise NotImplementedError(
            f"embedding tables too large for the VMEM-resident one-hot path "
            f"(need ~{vmem_limit} B, budget {budget} B)")
    vmem_limit = int(min(vmem_limit, budget))

    try:
        return _mf_forward_impl(b_idx, s_idx, buyer_table, seller_table,
                                tb=int(tb), vmem_limit=vmem_limit,
                                single_buffer_tables=_HAS_BUFFERED)
    except Exception:
        if _HAS_BUFFERED:
            # Safety net: retry with default double-buffered tables.
            return _mf_forward_impl(b_idx, s_idx, buyer_table, seller_table,
                                    tb=int(tb), vmem_limit=vmem_limit,
                                    single_buffer_tables=False)
        raise


if __name__ == "__main__":
    key = jax.random.PRNGKey(0)
    n_buyers, n_sellers, n_factors = 50, 40, 5
    B, K = 200, 2                    # indices shaped (B, K), as in the PyTorch usage

    kb, ks, kib, kis = jax.random.split(key, 4)
    # torch.nn.Embedding default init is N(0, 1)
    buyer_table = jax.random.normal(kb, (n_buyers, n_factors), dtype=jnp.float32)
    seller_table = jax.random.normal(ks, (n_sellers, n_factors), dtype=jnp.float32)
    b = jax.random.randint(kib, (B, K), 0, n_buyers, dtype=jnp.int32)
    s = jax.random.randint(kis, (B, K), 0, n_sellers, dtype=jnp.int32)

    out = matrix_factorization_forward(b, s, buyer_table, seller_table)
    out = jax.block_until_ready(out)

    # pure-JAX reference: (emb_b * emb_s).sum(1).sum(1)
    ref = jnp.sum(buyer_table[b] * seller_table[s], axis=(1, 2))
    assert out.shape == (B,)
    np.testing.assert_allclose(np.asarray(out), np.asarray(ref), rtol=1e-5, atol=1e-5)
    print("KERNEL_OK")
</pallas_src>

<mosaic_0001>
module attributes {stable_mosaic.version = 11 : i64} {
  func.func @_mf_kernel(%arg0: i32, %arg1: memref<1x512xi32, #tpu.memory_space<vmem>>, %arg2: memref<1x512xi32, #tpu.memory_space<vmem>>, %arg3: memref<5x50xf32, #tpu.memory_space<vmem>>, %arg4: memref<5x40xf32, #tpu.memory_space<vmem>>, %arg5: memref<1x256xf32, #tpu.memory_space<vmem>>) attributes {dimension_semantics = [#tpu.dimension_semantics<parallel>], iteration_bounds = array<i64: 1>, scalar_prefetch = 0 : i64, scratch_operands = 0 : i64, tpu.core_type = #tpu.core_type<tc>, window_params = [{transform_indices = @transform_0, window_bounds = array<i64: 1, 512>}, {transform_indices = @transform_1, window_bounds = array<i64: 1, 512>}, {pipeline_mode = #tpu.pipeline_mode<synchronous>, transform_indices = @transform_2, window_bounds = array<i64: 5, 50>}, {pipeline_mode = #tpu.pipeline_mode<synchronous>, transform_indices = @transform_3, window_bounds = array<i64: 5, 40>}, {transform_indices = @transform_4, window_bounds = array<i64: 1, 256>}]} {
    %c0 = arith.constant 0 : index
    %c0_0 = arith.constant 0 : index
    %0 = vector.load %arg3[%c0, %c0_0] : memref<5x50xf32, #tpu.memory_space<vmem>>, vector<5x50xf32>
    %c0_1 = arith.constant 0 : index
    %c0_2 = arith.constant 0 : index
    %1 = vector.load %arg4[%c0_1, %c0_2] : memref<5x40xf32, #tpu.memory_space<vmem>>, vector<5x40xf32>
    %c0_3 = arith.constant 0 : index
    %c0_4 = arith.constant 0 : index
    %2 = vector.load %arg1[%c0_3, %c0_4] : memref<1x512xi32, #tpu.memory_space<vmem>>, vector<1x512xi32>
    %c0_5 = arith.constant 0 : index
    %c0_6 = arith.constant 0 : index
    %3 = vector.load %arg2[%c0_5, %c0_6] : memref<1x512xi32, #tpu.memory_space<vmem>>, vector<1x512xi32>
    %4 = tpu.iota {dimensions = array<i32: 0>} : vector<50x512xi32>
    %5 = vector.broadcast %2 : vector<1x512xi32> to vector<50x512xi32>
    %6 = arith.cmpi eq, %4, %5 : vector<50x512xi32>
    %7 = arith.extui %6 : vector<50x512xi1> to vector<50x512xi32>
    %8 = arith.sitofp %7 : vector<50x512xi32> to vector<50x512xf32>
    %9 = tpu.iota {dimensions = array<i32: 0>} : vector<40x512xi32>
    %10 = vector.broadcast %3 : vector<1x512xi32> to vector<40x512xi32>
    %11 = arith.cmpi eq, %9, %10 : vector<40x512xi32>
    %12 = arith.extui %11 : vector<40x512xi1> to vector<40x512xi32>
    %13 = arith.sitofp %12 : vector<40x512xi32> to vector<40x512xf32>
    %cst = arith.constant dense<0.000000e+00> : vector<5x512xf32>
    %14 = tpu.matmul %0, %8, %cst {dimension_numbers = #tpu.dot_dimension_numbers<[1], [0], [0], [1], [0, 0, 1, 1], [], []>} : vector<5x50xf32>, vector<50x512xf32>, vector<5x512xf32> -> vector<5x512xf32>
    %cst_7 = arith.constant dense<0.000000e+00> : vector<5x512xf32>
    %15 = tpu.matmul %1, %13, %cst_7 {dimension_numbers = #tpu.dot_dimension_numbers<[1], [0], [0], [1], [0, 0, 1, 1], [], []>} : vector<5x40xf32>, vector<40x512xf32>, vector<5x512xf32> -> vector<5x512xf32>
    %16 = arith.mulf %14, %15 : vector<5x512xf32>
    %17 = vector.extract_strided_slice %16 {offsets = [0, 0], sizes = [5, 256], strides = [1, 1]} : vector<5x512xf32> to vector<5x256xf32>
    %18 = vector.extract_strided_slice %16 {offsets = [0, 256], sizes = [5, 256], strides = [1, 1]} : vector<5x512xf32> to vector<5x256xf32>
    %19 = arith.addf %17, %18 : vector<5x256xf32>
    %cst_8 = arith.constant dense<0.000000e+00> : vector<256xf32>
    %20 = vector.multi_reduction <add>, %19, %cst_8 [0] : vector<5x256xf32> to vector<256xf32>
    %21 = vector.shape_cast %20 : vector<256xf32> to vector<1x256xf32>
    %c0_9 = arith.constant 0 : index
    %c0_10 = arith.constant 0 : index
    %22 = vector.load %arg5[%c0_9, %c0_10] : memref<1x256xf32, #tpu.memory_space<vmem>>, vector<1x256xf32>
    tpu.vector_store %arg5[%c0_9, %c0_10], %21 {strides = array<i32>} : memref<1x256xf32, #tpu.memory_space<vmem>>, vector<1x256xf32>,
    return
  }
  func.func @transform_0(%arg0: i32) -> (i32, i32) {
    %c0_i32 = arith.constant 0 : i32
    %c0_i32_0 = arith.constant 0 : i32
    return %c0_i32, %arg0 : i32, i32
  }
  func.func @transform_1(%arg0: i32) -> (i32, i32) {
    %c0_i32 = arith.constant 0 : i32
    %c0_i32_0 = arith.constant 0 : i32
    return %c0_i32, %arg0 : i32, i32
  }
  func.func @transform_2(%arg0: i32) -> (i32, i32) {
    %c0_i32 = arith.constant 0 : i32
    %c0_i32_0 = arith.constant 0 : i32
    %c0_i32_1 = arith.constant 0 : i32
    return %c0_i32, %c0_i32_0 : i32, i32
  }
  func.func @transform_3(%arg0: i32) -> (i32, i32) {
    %c0_i32 = arith.constant 0 : i32
    %c0_i32_0 = arith.constant 0 : i32
    %c0_i32_1 = arith.constant 0 : i32
    return %c0_i32, %c0_i32_0 : i32, i32
  }
  func.func @transform_4(%arg0: i32) -> (i32, i32) {
    %c0_i32 = arith.constant 0 : i32
    %c0_i32_0 = arith.constant 0 : i32
    return %c0_i32, %arg0 : i32, i32
  }
}

module attributes {stable_mosaic.version = 11 : i64} {
  func.func @_mf_kernel(%arg0: i32, %arg1: memref<1x512xi32, #tpu.memory_space<vmem>>, %arg2: memref<1x512xi32, #tpu.memory_space<vmem>>, %arg3: memref<5x50xf32, #tpu.memory_space<vmem>>, %arg4: memref<5x40xf32, #tpu.memory_space<vmem>>, %arg5: memref<1x256xf32, #tpu.memory_space<vmem>>) attributes {dimension_semantics = [#tpu.dimension_semantics<parallel>], iteration_bounds = array<i64: 1>, scalar_prefetch = 0 : i64, scratch_operands = 0 : i64, tpu.core_type = #tpu.core_type<tc>, window_params = [{transform_indices = @transform_0, window_bounds = array<i64: 1, 512>}, {transform_indices = @transform_1, window_bounds = array<i64: 1, 512>}, {pipeline_mode = #tpu.pipeline_mode<synchronous>, transform_indices = @transform_2, window_bounds = array<i64: 5, 50>}, {pipeline_mode = #tpu.pipeline_mode<synchronous>, transform_indices = @transform_3, window_bounds = array<i64: 5, 40>}, {transform_indices = @transform_4, window_bounds = array<i64: 1, 256>}]} {
    %c0 = arith.constant 0 : index
    %c0_0 = arith.constant 0 : index
    %0 = vector.load %arg3[%c0, %c0_0] : memref<5x50xf32, #tpu.memory_space<vmem>>, vector<5x50xf32>
    %c0_1 = arith.constant 0 : index
    %c0_2 = arith.constant 0 : index
    %1 = vector.load %arg4[%c0_1, %c0_2] : memref<5x40xf32, #tpu.memory_space<vmem>>, vector<5x40xf32>
    %c0_3 = arith.constant 0 : index
    %c0_4 = arith.constant 0 : index
    %2 = vector.load %arg1[%c0_3, %c0_4] : memref<1x512xi32, #tpu.memory_space<vmem>>, vector<1x512xi32>
    %c0_5 = arith.constant 0 : index
    %c0_6 = arith.constant 0 : index
    %3 = vector.load %arg2[%c0_5, %c0_6] : memref<1x512xi32, #tpu.memory_space<vmem>>, vector<1x512xi32>
    %4 = tpu.iota {dimensions = array<i32: 0>} : vector<50x512xi32>
    %5 = vector.broadcast %2 : vector<1x512xi32> to vector<50x512xi32>
    %6 = arith.cmpi eq, %4, %5 : vector<50x512xi32>
    %7 = arith.extui %6 : vector<50x512xi1> to vector<50x512xi32>
    %8 = arith.sitofp %7 : vector<50x512xi32> to vector<50x512xf32>
    %9 = tpu.iota {dimensions = array<i32: 0>} : vector<40x512xi32>
    %10 = vector.broadcast %3 : vector<1x512xi32> to vector<40x512xi32>
    %11 = arith.cmpi eq, %9, %10 : vector<40x512xi32>
    %12 = arith.extui %11 : vector<40x512xi1> to vector<40x512xi32>
    %13 = arith.sitofp %12 : vector<40x512xi32> to vector<40x512xf32>
    %cst = arith.constant dense<0.000000e+00> : vector<5x512xf32>
    %14 = tpu.matmul %0, %8, %cst {dimension_numbers = #tpu.dot_dimension_numbers<[1], [0], [0], [1], [0, 0, 1, 1], [], []>} : vector<5x50xf32>, vector<50x512xf32>, vector<5x512xf32> -> vector<5x512xf32>
    %cst_7 = arith.constant dense<0.000000e+00> : vector<5x512xf32>
    %15 = tpu.matmul %1, %13, %cst_7 {dimension_numbers = #tpu.dot_dimension_numbers<[1], [0], [0], [1], [0, 0, 1, 1], [], []>} : vector<5x40xf32>, vector<40x512xf32>, vector<5x512xf32> -> vector<5x512xf32>
    %16 = arith.mulf %14, %15 : vector<5x512xf32>
    %17 = vector.extract_strided_slice %16 {offsets = [0, 0], sizes = [5, 256], strides = [1, 1]} : vector<5x512xf32> to vector<5x256xf32>
    %18 = vector.extract_strided_slice %16 {offsets = [0, 256], sizes = [5, 256], strides = [1, 1]} : vector<5x512xf32> to vector<5x256xf32>
    %19 = arith.addf %17, %18 : vector<5x256xf32>
    %cst_8 = arith.constant dense<0.000000e+00> : vector<256xf32>
    %20 = vector.multi_reduction <add>, %19, %cst_8 [0] : vector<5x256xf32> to vector<256xf32>
    %21 = vector.shape_cast %20 : vector<256xf32> to vector<1x256xf32>
    %c0_9 = arith.constant 0 : index
    %c0_10 = arith.constant 0 : index
    %22 = vector.load %arg5[%c0_9, %c0_10] : memref<1x256xf32, #tpu.memory_space<vmem>>, vector<1x256xf32>
    tpu.vector_store %arg5[%c0_9, %c0_10], %21 {strides = array<i32>} : memref<1x256xf32, #tpu.memory_space<vmem>>, vector<1x256xf32>,
    return
  }
  func.func @transform_0(%arg0: i32) -> (i32, i32) {
    %c0_i32 = arith.constant 0 : i32
    %c0_i32_0 = arith.constant 0 : i32
    return %c0_i32, %arg0 : i32, i32
  }
  func.func @transform_1(%arg0: i32) -> (i32, i32) {
    %c0_i32 = arith.constant 0 : i32
    %c0_i32_0 = arith.constant 0 : i32
    return %c0_i32, %arg0 : i32, i32
  }
  func.func @transform_2(%arg0: i32) -> (i32, i32) {
    %c0_i32 = arith.constant 0 : i32
    %c0_i32_0 = arith.constant 0 : i32
    %c0_i32_1 = arith.constant 0 : i32
    return %c0_i32, %c0_i32_0 : i32, i32
  }
  func.func @transform_3(%arg0: i32) -> (i32, i32) {
    %c0_i32 = arith.constant 0 : i32
    %c0_i32_0 = arith.constant 0 : i32
    %c0_i32_1 = arith.constant 0 : i32
    return %c0_i32, %c0_i32_0 : i32, i32
  }
  func.func @transform_4(%arg0: i32) -> (i32, i32) {
    %c0_i32 = arith.constant 0 : i32
    %c0_i32_0 = arith.constant 0 : i32
    return %c0_i32, %arg0 : i32, i32
  }
}

</mosaic_0001>

<llo_original>
// kernel: _mf_forward_impl.1
$region0: #{_mf_forward_impl.1}
  #allocation0 [shape = 'u32[]', space=smem, size = 0x4, offset = 0x4, fixed_abs, tag = 'smem constant byte address 0x4 - core index']
  #allocation1 [shape = 'u32[144,128]{1,0:T(1,128)}', space=vmem, size = 0x12000, scoped, tag = 'internal scratch']
  %s0 = inlined_call_operand.vmem [shape: s32[1,512], index: 0, kind: input, shape index: {}]
  %s1 = inlined_call_operand.vmem [shape: s32[1,512], index: 1, kind: input, shape index: {}]
  %s2 = inlined_call_operand.vmem [shape: f32[5,50], index: 2, kind: input, shape index: {}]
  %s3 = inlined_call_operand.vmem [shape: f32[5,40], index: 3, kind: input, shape index: {}]
  %s4 = inlined_call_operand.hbm [shape: f32[1,256], index: 4, kind: output, shape index: {}]
  %s5 = sld [smem:[#allocation0]]
  $region26: #{_mf_forward_impl.1} parent=0
    _
  %s7 = ssub.s32 1, %s5
  %s8 = scalar_select 0, %s7, %s5
  $region1: #{_mf_forward_impl.1} parent=0
    #allocation2 [shape = 'u8[1024]{0}', space=vmem, size = 0x400, scoped, tag = 'output window, operand 0, single buffered']
    #allocation3 [shape = 's32[1]{0}', space=sflag, size = 0x4, scoped, tag = 'scoped memory for _mf_forward_impl.1']
    %9 = vsyncpa [#allocation3], 0
    // Predicated region
    $region2: #{_mf_forward_impl.1} parent=1 // pred_check
      _
    $region3: #{_mf_forward_impl.1} parent=1 // pred_check_branch
      %11 = sbr.rel (0) target = $region5
    $region4: #{_mf_forward_impl.1} parent=1 // pred_region
      _
    $region5: #{_mf_forward_impl.1} parent=1 // pred_fallthru
      _
    // Predicated region
    $region6: #{_mf_forward_impl.1} parent=1 // pred_check
      _
    $region7: #{_mf_forward_impl.1} parent=1 // pred_check_branch
      %13 = sbr.rel (0) target = $region9
    $region8: #{_mf_forward_impl.1} parent=1 // pred_region
      _
    $region9: #{_mf_forward_impl.1} parent=1 // pred_fallthru
      _
    // Predicated region
    $region10: #{_mf_forward_impl.1} parent=1 // pred_check
      _
    $region11: #{_mf_forward_impl.1} parent=1 // pred_check_branch
      %15 = sbr.rel (0) target = $region13
    $region12: #{_mf_forward_impl.1} parent=1 // pred_region
      _
    $region13: #{_mf_forward_impl.1} parent=1 // pred_fallthru
      _
    // Predicated region
    $region14: #{_mf_forward_impl.1} parent=1 // pred_check
      _
    $region15: #{_mf_forward_impl.1} parent=1 // pred_check_branch
      %17 = sbr.rel (0) target = $region17
    $region16: #{_mf_forward_impl.1} parent=1 // pred_region
      _
    $region17: #{_mf_forward_impl.1} parent=1 // pred_fallthru
      _
    %v18 = vld [vmem:[%s2] sm:$0x1f]
    %v19 = vld [vmem:[%s3] sm:$0x1f]
    %v20 = vld [vmem:[%s0] sm:$0xf]
    %v21 = vld [vmem:[%s1] sm:$0xf]
    %v22 = vlaneseq
    %v23 = vshrl.u32 %v22, 7
    %v24 = vadd.s32 %v23, 8
    %v25 = vadd.s32 %v23, 16
    %v26 = vadd.s32 %v23, 24
    %v27 = vadd.s32 %v23, 32
    %v28 = vadd.s32 %v23, 40
    %v29 = vadd.s32 %v23, 48
    %v30 = vlaneseq
    %v31 = vshrl.u32 %v30, 7
    %v32 = vsub.s32 0, %v31
    %v33 = vrot.slane %v20, %v32
    %v34 = vlaneseq
    %v35 = vshrl.u32 %v34, 7
    %v36 = vsub.s32 1, %v35
    %v37 = vrot.slane %v20, %v36
    %v38 = vlaneseq
    %v39 = vshrl.u32 %v38, 7
    %v40 = vsub.s32 2, %v39
    %v41 = vrot.slane %v20, %v40
    %v42 = vlaneseq
    %v43 = vshrl.u32 %v42, 7
    %v44 = vsub.s32 3, %v43
    %v45 = vrot.slane %v20, %v44
    %vm46 = vcmp.eq.s32.totalorder %v23, %v33
    %vm47 = vcmp.eq.s32.totalorder %v23, %v37
    %vm48 = vcmp.eq.s32.totalorder %v23, %v41
    %vm49 = vcmp.eq.s32.totalorder %v23, %v45
    %vm50 = vcmp.eq.s32.totalorder %v24, %v33
    %vm51 = vcmp.eq.s32.totalorder %v24, %v37
    %vm52 = vcmp.eq.s32.totalorder %v24, %v41
    %vm53 = vcmp.eq.s32.totalorder %v24, %v45
    %vm54 = vcmp.eq.s32.totalorder %v25, %v33
    %vm55 = vcmp.eq.s32.totalorder %v25, %v37
    %vm56 = vcmp.eq.s32.totalorder %v25, %v41
    %vm57 = vcmp.eq.s32.totalorder %v25, %v45
    %vm58 = vcmp.eq.s32.totalorder %v26, %v33
    %vm59 = vcmp.eq.s32.totalorder %v26, %v37
    %vm60 = vcmp.eq.s32.totalorder %v26, %v41
    %vm61 = vcmp.eq.s32.totalorder %v26, %v45
    %vm62 = vcmp.eq.s32.totalorder %v27, %v33
    %vm63 = vcmp.eq.s32.totalorder %v27, %v37
    %vm64 = vcmp.eq.s32.totalorder %v27, %v41
    %vm65 = vcmp.eq.s32.totalorder %v27, %v45
    %vm66 = vcmp.eq.s32.totalorder %v28, %v33
    %vm67 = vcmp.eq.s32.totalorder %v28, %v37
    %vm68 = vcmp.eq.s32.totalorder %v28, %v41
    %vm69 = vcmp.eq.s32.totalorder %v28, %v45
    %vm70 = vcmp.eq.s32.totalorder %v29, %v33
    %vm71 = vcmp.eq.s32.totalorder %v29, %v37
    %vm72 = vcmp.eq.s32.totalorder %v29, %v41
    %vm73 = vcmp.eq.s32.totalorder %v29, %v45
    %v74 = vsel %vm46, 1, 0
    %v75 = vsel %vm47, 1, 0
    %v76 = vsel %vm48, 1, 0
    %v77 = vsel %vm49, 1, 0
    %v78 = vsel %vm50, 1, 0
    %v79 = vsel %vm51, 1, 0
    %v80 = vsel %vm52, 1, 0
    %v81 = vsel %vm53, 1, 0
    %v82 = vsel %vm54, 1, 0
    %v83 = vsel %vm55, 1, 0
    %v84 = vsel %vm56, 1, 0
    %v85 = vsel %vm57, 1, 0
    %v86 = vsel %vm58, 1, 0
    %v87 = vsel %vm59, 1, 0
    %v88 = vsel %vm60, 1, 0
    %v89 = vsel %vm61, 1, 0
    %v90 = vsel %vm62, 1, 0
    %v91 = vsel %vm63, 1, 0
    %v92 = vsel %vm64, 1, 0
    %v93 = vsel %vm65, 1, 0
    %v94 = vsel %vm66, 1, 0
    %v95 = vsel %vm67, 1, 0
    %v96 = vsel %vm68, 1, 0
    %v97 = vsel %vm69, 1, 0
    %v98 = vsel %vm70, 1, 0
    %v99 = vsel %vm71, 1, 0
    %v100 = vsel %vm72, 1, 0
    %v101 = vsel %vm73, 1, 0
    %v102 = vcvt.s32.f32 %v74
    %v103 = vcvt.s32.f32 %v75
    %v104 = vcvt.s32.f32 %v76
    %v105 = vcvt.s32.f32 %v77
    %v106 = vcvt.s32.f32 %v78
    %v107 = vcvt.s32.f32 %v79
    %v108 = vcvt.s32.f32 %v80
    %v109 = vcvt.s32.f32 %v81
    %v110 = vcvt.s32.f32 %v82
    %v111 = vcvt.s32.f32 %v83
    %v112 = vcvt.s32.f32 %v84
    %v113 = vcvt.s32.f32 %v85
    %v114 = vcvt.s32.f32 %v86
    %v115 = vcvt.s32.f32 %v87
    %v116 = vcvt.s32.f32 %v88
    %v117 = vcvt.s32.f32 %v89
    %v118 = vcvt.s32.f32 %v90
    %v119 = vcvt.s32.f32 %v91
    %v120 = vcvt.s32.f32 %v92
    %v121 = vcvt.s32.f32 %v93
    %v122 = vcvt.s32.f32 %v94
    %v123 = vcvt.s32.f32 %v95
    %v124 = vcvt.s32.f32 %v96
    %v125 = vcvt.s32.f32 %v97
    %v126 = vcvt.s32.f32 %v98
    %v127 = vcvt.s32.f32 %v99
    %v128 = vcvt.s32.f32 %v100
    %v129 = vcvt.s32.f32 %v101
    %v130 = vlaneseq
    %v131 = vshrl.u32 %v130, 7
    %v132 = vsub.s32 0, %v131
    %v133 = vrot.slane %v21, %v132
    %v134 = vlaneseq
    %v135 = vshrl.u32 %v134, 7
    %v136 = vsub.s32 1, %v135
    %v137 = vrot.slane %v21, %v136
    %v138 = vlaneseq
    %v139 = vshrl.u32 %v138, 7
    %v140 = vsub.s32 2, %v139
    %v141 = vrot.slane %v21, %v140
    %v142 = vlaneseq
    %v143 = vshrl.u32 %v142, 7
    %v144 = vsub.s32 3, %v143
    %v145 = vrot.slane %v21, %v144
    %vm146 = vcmp.eq.s32.totalorder %v23, %v133
    %vm147 = vcmp.eq.s32.totalorder %v23, %v137
    %vm148 = vcmp.eq.s32.totalorder %v23, %v141
    %vm149 = vcmp.eq.s32.totalorder %v23, %v145
    %vm150 = vcmp.eq.s32.totalorder %v24, %v133
    %vm151 = vcmp.eq.s32.totalorder %v24, %v137
    %vm152 = vcmp.eq.s32.totalorder %v24, %v141
    %vm153 = vcmp.eq.s32.totalorder %v24, %v145
    %vm154 = vcmp.eq.s32.totalorder %v25, %v133
    %vm155 = vcmp.eq.s32.totalorder %v25, %v137
    %vm156 = vcmp.eq.s32.totalorder %v25, %v141
    %vm157 = vcmp.eq.s32.totalorder %v25, %v145
    %vm158 = vcmp.eq.s32.totalorder %v26, %v133
    %vm159 = vcmp.eq.s32.totalorder %v26, %v137
    %vm160 = vcmp.eq.s32.totalorder %v26, %v141
    %vm161 = vcmp.eq.s32.totalorder %v26, %v145
    %vm162 = vcmp.eq.s32.totalorder %v27, %v133
    %vm163 = vcmp.eq.s32.totalorder %v27, %v137
    %vm164 = vcmp.eq.s32.totalorder %v27, %v141
    %vm165 = vcmp.eq.s32.totalorder %v27, %v145
    %v166 = vsel %vm146, 1, 0
    %v167 = vsel %vm147, 1, 0
    %v168 = vsel %vm148, 1, 0
    %v169 = vsel %vm149, 1, 0
    %v170 = vsel %vm150, 1, 0
    %v171 = vsel %vm151, 1, 0
    %v172 = vsel %vm152, 1, 0
    %v173 = vsel %vm153, 1, 0
    %v174 = vsel %vm154, 1, 0
    %v175 = vsel %vm155, 1, 0
    %v176 = vsel %vm156, 1, 0
    %v177 = vsel %vm157, 1, 0
    %v178 = vsel %vm158, 1, 0
    %v179 = vsel %vm159, 1, 0
    %v180 = vsel %vm160, 1, 0
    %v181 = vsel %vm161, 1, 0
    %v182 = vsel %vm162, 1, 0
    %v183 = vsel %vm163, 1, 0
    %v184 = vsel %vm164, 1, 0
    %v185 = vsel %vm165, 1, 0
    %v186 = vcvt.s32.f32 %v166
    %v187 = vcvt.s32.f32 %v167
    %v188 = vcvt.s32.f32 %v168
    %v189 = vcvt.s32.f32 %v169
    %v190 = vcvt.s32.f32 %v170
    %v191 = vcvt.s32.f32 %v171
    %v192 = vcvt.s32.f32 %v172
    %v193 = vcvt.s32.f32 %v173
    %v194 = vcvt.s32.f32 %v174
    %v195 = vcvt.s32.f32 %v175
    %v196 = vcvt.s32.f32 %v176
    %v197 = vcvt.s32.f32 %v177
    %v198 = vcvt.s32.f32 %v178
    %v199 = vcvt.s32.f32 %v179
    %v200 = vcvt.s32.f32 %v180
    %v201 = vcvt.s32.f32 %v181
    %v202 = vcvt.s32.f32 %v182
    %v203 = vcvt.s32.f32 %v183
    %v204 = vcvt.s32.f32 %v184
    %v205 = vcvt.s32.f32 %v185
    %vm206 = vcmask 408576
    %v208 = vsel %vm206, %v18, 0
    %vm210 = vcmask 1041408
    %v212 = vsel %vm210, %v126, 0
    %v215 = vsel %vm210, %v127, 0
    %v218 = vsel %vm210, %v128, 0
    %v221 = vsel %vm210, %v129, 0
    %223 = vmatprep.subr.mxu0 %v103
    %224 = vmatpush1.msra.mxu0 %v102
    %225 = vmatprep.subr.mxu0 %v107
    %226 = vmatpush1.msra.mxu0 %v106
    %227 = vmatprep.subr.mxu0 %v111
    %228 = vmatpush1.msra.mxu0 %v110
    %229 = vmatprep.subr.mxu0 %v115
    %230 = vmatpush1.msra.mxu0 %v114
    %231 = vmatprep.subr.mxu0 %v119
    %232 = vmatpush1.msra.mxu0 %v118
    %233 = vmatprep.subr.mxu0 %v123
    %234 = vmatpush1.msra.mxu0 %v122
    %235 = vmatprep.subr.mxu0 %v215
    %236 = vmatpush1.msra.mxu0 %v212
    %237 = vmatprep.subr.mxu0 0.0
    %238 = vmatpush1.msra.mxu0 0.0
    %239 = vmatprep.subr.mxu0 0.0
    %240 = vmatpush1.msra.mxu0 0.0
    %241 = vmatprep.subr.mxu0 0.0
    %242 = vmatpush1.msra.mxu0 0.0
    %243 = vmatprep.subr.mxu0 0.0
    %244 = vmatpush1.msra.mxu0 0.0
    %245 = vmatprep.subr.mxu0 0.0
    %246 = vmatpush1.msra.mxu0 0.0
    %247 = vmatprep.subr.mxu0 0.0
    %248 = vmatpush1.msra.mxu0 0.0
    %249 = vmatprep.subr.mxu0 0.0
    %250 = vmatpush1.msra.mxu0 0.0
    %251 = vmatprep.subr.mxu0 0.0
    %252 = vmatpush1.msra.mxu0 0.0
    %253 = vmatprep.subr.mxu0 0.0
    %254 = vmatpush1.msra.mxu0 0.0
    %255 = vmatprep.subr.mxu0 0.0
    %256 = vmatpush1.msra.mxu0 0.0
    %257 = vmatprep.subr.mxu0 0.0
    %258 = vmatpush1.msra.mxu0 0.0
    %259 = vmatprep.subr.mxu0 0.0
    %260 = vmatpush1.msra.mxu0 0.0
    %261 = vmatprep.subr.mxu0 0.0
    %262 = vmatpush1.msra.mxu0 0.0
    %263 = vmatprep.subr.mxu0 0.0
    %264 = vmatpush1.msra.mxu0 0.0
    %265 = vmatprep.subr.mxu0 0.0
    %266 = vmatpush1.msra.mxu0 0.0
    %267 = vmatprep.subr.mxu0 0.0
    %268 = vmatpush1.msra.mxu0 0.0
    %269 = vmatprep.subr.mxu0 0.0
    %270 = vmatpush1.msra.mxu0 0.0
    %271 = vmatprep.subr.mxu0 0.0
    %272 = vmatpush1.msra.mxu0 0.0
    %273 = vmatprep.subr.mxu0 0.0
    %274 = vmatpush1.msra.mxu0 0.0
    %275 = vmatprep.subr.mxu0 0.0
    %276 = vmatpush1.msra.mxu0 0.0
    %277 = vmatprep.subr.mxu0 0.0
    %278 = vmatpush1.msra.mxu0 0.0
    %279 = vmatprep.subr.mxu0 0.0
    %280 = vmatpush1.msra.mxu0 0.0
    %281 = vmatprep.subr.mxu0 0.0
    %282 = vmatpush1.msra.mxu0 0.0
    %283 = vmatprep.subr.mxu0 0.0
    %284 = vmatpush1.msra.mxu0 0.0
    %285 = vmatprep.subr.mxu0 0.0
    %286 = vmatpush1.msra.mxu0 0.0
    %287 = vmatprep.mubr.f32.mxu0 0.0
    %288 = vmatmul.mubr.f32.gmra.mrb[0].mxu0 %v208
    %v289 = vpop.f32.mrb[0].mxu0
    %v290 = vadd.f32 0.0, %v289
    %v291 = vpop.f32.mrb[0].mxu0
    %v292 = vadd.f32 0.0, %v291
    %293 = vdwg.mxu0
    %294 = vmatprep.subr.mxu0 %v105
    %295 = vmatpush1.msra.mxu0 %v104
    %296 = vmatprep.subr.mxu0 %v109
    %297 = vmatpush1.msra.mxu0 %v108
    %298 = vmatprep.subr.mxu0 %v113
    %299 = vmatpush1.msra.mxu0 %v112
    %300 = vmatprep.subr.mxu0 %v117
    %301 = vmatpush1.msra.mxu0 %v116
    %302 = vmatprep.subr.mxu0 %v121
    %303 = vmatpush1.msra.mxu0 %v120
    %304 = vmatprep.subr.mxu0 %v125
    %305 = vmatpush1.msra.mxu0 %v124
    %306 = vmatprep.subr.mxu0 %v221
    %307 = vmatpush1.msra.mxu0 %v218
    %308 = vmatprep.subr.mxu0 0.0
    %309 = vmatpush1.msra.mxu0 0.0
    %310 = vmatprep.subr.mxu0 0.0
    %311 = vmatpush1.msra.mxu0 0.0
    %312 = vmatprep.subr.mxu0 0.0
    %313 = vmatpush1.msra.mxu0 0.0
    %314 = vmatprep.subr.mxu0 0.0
    %315 = vmatpush1.msra.mxu0 0.0
    %316 = vmatprep.subr.mxu0 0.0
    %317 = vmatpush1.msra.mxu0 0.0
    %318 = vmatprep.subr.mxu0 0.0
    %319 = vmatpush1.msra.mxu0 0.0
    %320 = vmatprep.subr.mxu0 0.0
    %321 = vmatpush1.msra.mxu0 0.0
    %322 = vmatprep.subr.mxu0 0.0
    %323 = vmatpush1.msra.mxu0 0.0
    %324 = vmatprep.subr.mxu0 0.0
    %325 = vmatpush1.msra.mxu0 0.0
    %326 = vmatprep.subr.mxu0 0.0
    %327 = vmatpush1.msra.mxu0 0.0
    %328 = vmatprep.subr.mxu0 0.0
    %329 = vmatpush1.msra.mxu0 0.0
    %330 = vmatprep.subr.mxu0 0.0
    %331 = vmatpush1.msra.mxu0 0.0
    %332 = vmatprep.subr.mxu0 0.0
    %333 = vmatpush1.msra.mxu0 0.0
    %334 = vmatprep.subr.mxu0 0.0
    %335 = vmatpush1.msra.mxu0 0.0
    %336 = vmatprep.subr.mxu0 0.0
    %337 = vmatpush1.msra.mxu0 0.0
    %338 = vmatprep.subr.mxu0 0.0
    %339 = vmatpush1.msra.mxu0 0.0
    %340 = vmatprep.subr.mxu0 0.0
    %341 = vmatpush1.msra.mxu0 0.0
    %342 = vmatprep.subr.mxu0 0.0
    %343 = vmatpush1.msra.mxu0 0.0
    %344 = vmatprep.subr.mxu0 0.0
    %345 = vmatpush1.msra.mxu0 0.0
    %346 = vmatprep.subr.mxu0 0.0
    %347 = vmatpush1.msra.mxu0 0.0
    %348 = vmatprep.subr.mxu0 0.0
    %349 = vmatpush1.msra.mxu0 0.0
    %350 = vmatprep.subr.mxu0 0.0
    %351 = vmatpush1.msra.mxu0 0.0
    %352 = vmatprep.subr.mxu0 0.0
    %353 = vmatpush1.msra.mxu0 0.0
    %354 = vmatprep.subr.mxu0 0.0
    %355 = vmatpush1.msra.mxu0 0.0
    %356 = vmatprep.subr.mxu0 0.0
    %357 = vmatpush1.msra.mxu0 0.0
    %358 = vmatprep.mubr.f32.mxu0 0.0
    %359 = vmatmul.mubr.f32.gmra.mrb[0].mxu0 %v208
    %v360 = vpop.f32.mrb[0].mxu0
    %v361 = vadd.f32 0.0, %v360
    %v362 = vpop.f32.mrb[0].mxu0
    %v363 = vadd.f32 0.0, %v362
    %364 = vdwg.mxu0
    %vm365 = vcmask 326656
    %v367 = vsel %vm365, %v19, 0
    %369 = vmatprep.subr.mxu0 %v187
    %370 = vmatpush1.msra.mxu0 %v186
    %371 = vmatprep.subr.mxu0 %v191
    %372 = vmatpush1.msra.mxu0 %v190
    %373 = vmatprep.subr.mxu0 %v195
    %374 = vmatpush1.msra.mxu0 %v194
    %375 = vmatprep.subr.mxu0 %v199
    %376 = vmatpush1.msra.mxu0 %v198
    %377 = vmatprep.subr.mxu0 %v203
    %378 = vmatpush1.msra.mxu0 %v202
    %379 = vmatprep.subr.mxu0 0.0
    %380 = vmatpush1.msra.mxu0 0.0
    %381 = vmatprep.subr.mxu0 0.0
    %382 = vmatpush1.msra.mxu0 0.0
    %383 = vmatprep.subr.mxu0 0.0
    %384 = vmatpush1.msra.mxu0 0.0
    %385 = vmatprep.subr.mxu0 0.0
    %386 = vmatpush1.msra.mxu0 0.0
    %387 = vmatprep.subr.mxu0 0.0
    %388 = vmatpush1.msra.mxu0 0.0
    %389 = vmatprep.subr.mxu0 0.0
    %390 = vmatpush1.msra.mxu0 0.0
    %391 = vmatprep.subr.mxu0 0.0
    %392 = vmatpush1.msra.mxu0 0.0
    %393 = vmatprep.subr.mxu0 0.0
    %394 = vmatpush1.msra.mxu0 0.0
    %395 = vmatprep.subr.mxu0 0.0
    %396 = vmatpush1.msra.mxu0 0.0
    %397 = vmatprep.subr.mxu0 0.0
    %398 = vmatpush1.msra.mxu0 0.0
    %399 = vmatprep.subr.mxu0 0.0
    %400 = vmatpush1.msra.mxu0 0.0
    %401 = vmatprep.subr.mxu0 0.0
    %402 = vmatpush1.msra.mxu0 0.0
    %403 = vmatprep.subr.mxu0 0.0
    %404 = vmatpush1.msra.mxu0 0.0
    %405 = vmatprep.subr.mxu0 0.0
    %406 = vmatpush1.msra.mxu0 0.0
    %407 = vmatprep.subr.mxu0 0.0
    %408 = vmatpush1.msra.mxu0 0.0
    %409 = vmatprep.subr.mxu0 0.0
    %410 = vmatpush1.msra.mxu0 0.0
    %411 = vmatprep.subr.mxu0 0.0
    %412 = vmatpush1.msra.mxu0 0.0
    %413 = vmatprep.subr.mxu0 0.0
    %414 = vmatpush1.msra.mxu0 0.0
    %415 = vmatprep.subr.mxu0 0.0
    %416 = vmatpush1.msra.mxu0 0.0
    %417 = vmatprep.subr.mxu0 0.0
    %418 = vmatpush1.msra.mxu0 0.0
    %419 = vmatprep.subr.mxu0 0.0
    %420 = vmatpush1.msra.mxu0 0.0
    %421 = vmatprep.subr.mxu0 0.0
    %422 = vmatpush1.msra.mxu0 0.0
    %423 = vmatprep.subr.mxu0 0.0
    %424 = vmatpush1.msra.mxu0 0.0
    %425 = vmatprep.subr.mxu0 0.0
    %426 = vmatpush1.msra.mxu0 0.0
    %427 = vmatprep.subr.mxu0 0.0
    %428 = vmatpush1.msra.mxu0 0.0
    %429 = vmatprep.subr.mxu0 0.0
    %430 = vmatpush1.msra.mxu0 0.0
    %431 = vmatprep.subr.mxu0 0.0
    %432 = vmatpush1.msra.mxu0 0.0
    %433 = vmatprep.mubr.f32.mxu0 0.0
    %434 = vmatmul.mubr.f32.gmra.mrb[0].mxu0 %v367
    %v435 = vpop.f32.mrb[0].mxu0
    %v436 = vadd.f32 0.0, %v435
    %v437 = vpop.f32.mrb[0].mxu0
    %v438 = vadd.f32 0.0, %v437
    %439 = vdwg.mxu0
    %440 = vmatprep.subr.mxu0 %v189
    %441 = vmatpush1.msra.mxu0 %v188
    %442 = vmatprep.subr.mxu0 %v193
    %443 = vmatpush1.msra.mxu0 %v192
    %444 = vmatprep.subr.mxu0 %v197
    %445 = vmatpush1.msra.mxu0 %v196
    %446 = vmatprep.subr.mxu0 %v201
    %447 = vmatpush1.msra.mxu0 %v200
    %448 = vmatprep.subr.mxu0 %v205
    %449 = vmatpush1.msra.mxu0 %v204
    %450 = vmatprep.subr.mxu0 0.0
    %451 = vmatpush1.msra.mxu0 0.0
    %452 = vmatprep.subr.mxu0 0.0
    %453 = vmatpush1.msra.mxu0 0.0
    %454 = vmatprep.subr.mxu0 0.0
    %455 = vmatpush1.msra.mxu0 0.0
    %456 = vmatprep.subr.mxu0 0.0
    %457 = vmatpush1.msra.mxu0 0.0
    %458 = vmatprep.subr.mxu0 0.0
    %459 = vmatpush1.msra.mxu0 0.0
    %460 = vmatprep.subr.mxu0 0.0
    %461 = vmatpush1.msra.mxu0 0.0
    %462 = vmatprep.subr.mxu0 0.0
    %463 = vmatpush1.msra.mxu0 0.0
    %464 = vmatprep.subr.mxu0 0.0
    %465 = vmatpush1.msra.mxu0 0.0
    %466 = vmatprep.subr.mxu0 0.0
    %467 = vmatpush1.msra.mxu0 0.0
    %468 = vmatprep.subr.mxu0 0.0
    %469 = vmatpush1.msra.mxu0 0.0
    %470 = vmatprep.subr.mxu0 0.0
    %471 = vmatpush1.msra.mxu0 0.0
    %472 = vmatprep.subr.mxu0 0.0
    %473 = vmatpush1.msra.mxu0 0.0
    %474 = vmatprep.subr.mxu0 0.0
    %475 = vmatpush1.msra.mxu0 0.0
    %476 = vmatprep.subr.mxu0 0.0
    %477 = vmatpush1.msra.mxu0 0.0
    %478 = vmatprep.subr.mxu0 0.0
    %479 = vmatpush1.msra.mxu0 0.0
    %480 = vmatprep.subr.mxu0 0.0
    %481 = vmatpush1.msra.mxu0 0.0
    %482 = vmatprep.subr.mxu0 0.0
    %483 = vmatpush1.msra.mxu0 0.0
    %484 = vmatprep.subr.mxu0 0.0
    %485 = vmatpush1.msra.mxu0 0.0
    %486 = vmatprep.subr.mxu0 0.0
    %487 = vmatpush1.msra.mxu0 0.0
    %488 = vmatprep.subr.mxu0 0.0
    %489 = vmatpush1.msra.mxu0 0.0
    %490 = vmatprep.subr.mxu0 0.0
    %491 = vmatpush1.msra.mxu0 0.0
    %492 = vmatprep.subr.mxu0 0.0
    %493 = vmatpush1.msra.mxu0 0.0
    %494 = vmatprep.subr.mxu0 0.0
    %495 = vmatpush1.msra.mxu0 0.0
    %496 = vmatprep.subr.mxu0 0.0
    %497 = vmatpush1.msra.mxu0 0.0
    %498 = vmatprep.subr.mxu0 0.0
    %499 = vmatpush1.msra.mxu0 0.0
    %500 = vmatprep.subr.mxu0 0.0
    %501 = vmatpush1.msra.mxu0 0.0
    %502 = vmatprep.subr.mxu0 0.0
    %503 = vmatpush1.msra.mxu0 0.0
    %504 = vmatprep.mubr.f32.mxu0 0.0
    %505 = vmatmul.mubr.f32.gmra.mrb[0].mxu0 %v367
    %v506 = vpop.f32.mrb[0].mxu0
    %v507 = vadd.f32 0.0, %v506
    %v508 = vpop.f32.mrb[0].mxu0
    %v509 = vadd.f32 0.0, %v508
    %510 = vdwg.mxu0
    %v511 = vmul.f32 %v290, %v436
    %v512 = vmul.f32 %v292, %v438
    %v513 = vmul.f32 %v361, %v507
    %v514 = vmul.f32 %v363, %v509
    %v515 = vadd.f32 %v511, %v513
    %v516 = vadd.f32 %v512, %v514
    %vm517 = vcmask 1044480
    %v518 = vsel %vm517, %v515, 0.0
    %v519 = vrot.slane %v518, 4
    %v520 = vadd.f32 %v518, %v519
    %v521 = vrot.slane %v520, 2
    %v522 = vadd.f32 %v520, %v521
    %v523 = vrot.slane %v522, 1
    %v524 = vadd.f32 %v522, %v523
    %v525 = vsel %vm517, %v516, 0.0
    %v526 = vrot.slane %v525, 4
    %v527 = vadd.f32 %v525, %v526
    %v528 = vrot.slane %v527, 2
    %v529 = vadd.f32 %v527, %v528
    %v530 = vrot.slane %v529, 1
    %v531 = vadd.f32 %v529, %v530
    %v534 = vcombine.low %v524, %v531
    %v536 = vunpack.c.l.s4 1966171168
    %v537 = vunpack.c.0.s8 %v536
    %v538 = vlaneseq
    %v539 = vshrl.u32 %v538, 7
    %v540 = vsub.s32 %v537, %v539
    %v541 = vrot.slane %v534, %v540
    %v543 = vunpack.c.l.s4 1966171168
    %v544 = vunpack.c.0.s8 %v543
    %v545 = vlaneseq
    %v546 = vshrl.u32 %v545, 7
    %v547 = vsub.s32 %v544, %v546
    %v548 = vrot.slane %v541, %v547
    %v550 = vlaneseq
    %vm551 = vcmp.ge.s32.totalorder %v550, 0
    %vm552 = vcmp.lt.s32.totalorder %v550, 256
    %vm553 = vmand %vm551, %vm552
    %554 = vst.msk [vmem:[#allocation2] sm:$0x3] %vm553, %v548
    // Predicated region
    $region18: #{_mf_forward_impl.1} parent=1 // pred_check
      _
    $region19: #{_mf_forward_impl.1} parent=1 // pred_check_branch
      %556 = sbr.rel (0) target = $region21
    $region20: #{_mf_forward_impl.1} parent=1 // pred_region
      %s558 = ssub.s32 32, 32
      %559 = vsyncadd [#allocation3], %s558
      %s561 = sshll.u32 [#allocation2], 4
      %s562 = int_to_ptr.vmem [resolvable:$true] %s561
      %564 = dma.vmem_to_hbm [thread:$0]  %s562, 32, %s4, [#allocation3]
    $region21: #{_mf_forward_impl.1} parent=1 // pred_fallthru
      _
    // Predicated region
    $region22: #{_mf_forward_impl.1} parent=1 // pred_check
      _
    $region23: #{_mf_forward_impl.1} parent=1 // pred_check_branch
      %566 = sbr.rel (0) target = $region25
    $region24: #{_mf_forward_impl.1} parent=1 // pred_region
      %567 = dma.done [#allocation3], 32
    $region25: #{_mf_forward_impl.1} parent=1 // pred_fallthru
      _
    %568 = vsyncpa [#allocation3], 1

// kernel: _mf_forward_impl.1
$region0: #{_mf_forward_impl.1}
  #allocation0 [shape = 'u32[]', space=smem, size = 0x4, offset = 0x4, fixed_abs, tag = 'smem constant byte address 0x4 - core index']
  #allocation1 [shape = 'u32[144,128]{1,0:T(1,128)}', space=vmem, size = 0x12000, scoped, tag = 'internal scratch']
  %s0 = inlined_call_operand.vmem [shape: s32[1,512], index: 0, kind: input, shape index: {}]
  %s1 = inlined_call_operand.vmem [shape: s32[1,512], index: 1, kind: input, shape index: {}]
  %s2 = inlined_call_operand.vmem [shape: f32[5,50], index: 2, kind: input, shape index: {}]
  %s3 = inlined_call_operand.vmem [shape: f32[5,40], index: 3, kind: input, shape index: {}]
  %s4 = inlined_call_operand.hbm [shape: f32[1,256], index: 4, kind: output, shape index: {}]
  %s5 = sld [smem:[#allocation0]]
  $region26: #{_mf_forward_impl.1} parent=0
    _
  %s7 = ssub.s32 1, %s5
  %s8 = scalar_select 0, %s7, %s5
  $region1: #{_mf_forward_impl.1} parent=0
    #allocation2 [shape = 'u8[1024]{0}', space=vmem, size = 0x400, scoped, tag = 'output window, operand 0, single buffered']
    #allocation3 [shape = 's32[1]{0}', space=sflag, size = 0x4, scoped, tag = 'scoped memory for _mf_forward_impl.1']
    %9 = vsyncpa [#allocation3], 0
    // Predicated region
    $region2: #{_mf_forward_impl.1} parent=1 // pred_check
      _
    $region3: #{_mf_forward_impl.1} parent=1 // pred_check_branch
      %11 = sbr.rel (0) target = $region5
    $region4: #{_mf_forward_impl.1} parent=1 // pred_region
      _
    $region5: #{_mf_forward_impl.1} parent=1 // pred_fallthru
      _
    // Predicated region
    $region6: #{_mf_forward_impl.1} parent=1 // pred_check
      _
    $region7: #{_mf_forward_impl.1} parent=1 // pred_check_branch
      %13 = sbr.rel (0) target = $region9
    $region8: #{_mf_forward_impl.1} parent=1 // pred_region
      _
    $region9: #{_mf_forward_impl.1} parent=1 // pred_fallthru
      _
    // Predicated region
    $region10: #{_mf_forward_impl.1} parent=1 // pred_check
      _
    $region11: #{_mf_forward_impl.1} parent=1 // pred_check_branch
      %15 = sbr.rel (0) target = $region13
    $region12: #{_mf_forward_impl.1} parent=1 // pred_region
      _
    $region13: #{_mf_forward_impl.1} parent=1 // pred_fallthru
      _
    // Predicated region
    $region14: #{_mf_forward_impl.1} parent=1 // pred_check
      _
    $region15: #{_mf_forward_impl.1} parent=1 // pred_check_branch
      %17 = sbr.rel (0) target = $region17
    $region16: #{_mf_forward_impl.1} parent=1 // pred_region
      _
    $region17: #{_mf_forward_impl.1} parent=1 // pred_fallthru
      _
    %v18 = vld [vmem:[%s2] sm:$0x1f]
    %v19 = vld [vmem:[%s3] sm:$0x1f]
    %v20 = vld [vmem:[%s0] sm:$0xf]
    %v21 = vld [vmem:[%s1] sm:$0xf]
    %v22 = vlaneseq
    %v23 = vshrl.u32 %v22, 7
    %v24 = vadd.s32 %v23, 8
    %v25 = vadd.s32 %v23, 16
    %v26 = vadd.s32 %v23, 24
    %v27 = vadd.s32 %v23, 32
    %v28 = vadd.s32 %v23, 40
    %v29 = vadd.s32 %v23, 48
    %v30 = vlaneseq
    %v31 = vshrl.u32 %v30, 7
    %v32 = vsub.s32 0, %v31
    %v33 = vrot.slane %v20, %v32
    %v34 = vlaneseq
    %v35 = vshrl.u32 %v34, 7
    %v36 = vsub.s32 1, %v35
    %v37 = vrot.slane %v20, %v36
    %v38 = vlaneseq
    %v39 = vshrl.u32 %v38, 7
    %v40 = vsub.s32 2, %v39
    %v41 = vrot.slane %v20, %v40
    %v42 = vlaneseq
    %v43 = vshrl.u32 %v42, 7
    %v44 = vsub.s32 3, %v43
    %v45 = vrot.slane %v20, %v44
    %vm46 = vcmp.eq.s32.totalorder %v23, %v33
    %vm47 = vcmp.eq.s32.totalorder %v23, %v37
    %vm48 = vcmp.eq.s32.totalorder %v23, %v41
    %vm49 = vcmp.eq.s32.totalorder %v23, %v45
    %vm50 = vcmp.eq.s32.totalorder %v24, %v33
    %vm51 = vcmp.eq.s32.totalorder %v24, %v37
    %vm52 = vcmp.eq.s32.totalorder %v24, %v41
    %vm53 = vcmp.eq.s32.totalorder %v24, %v45
    %vm54 = vcmp.eq.s32.totalorder %v25, %v33
    %vm55 = vcmp.eq.s32.totalorder %v25, %v37
    %vm56 = vcmp.eq.s32.totalorder %v25, %v41
    %vm57 = vcmp.eq.s32.totalorder %v25, %v45
    %vm58 = vcmp.eq.s32.totalorder %v26, %v33
    %vm59 = vcmp.eq.s32.totalorder %v26, %v37
    %vm60 = vcmp.eq.s32.totalorder %v26, %v41
    %vm61 = vcmp.eq.s32.totalorder %v26, %v45
    %vm62 = vcmp.eq.s32.totalorder %v27, %v33
    %vm63 = vcmp.eq.s32.totalorder %v27, %v37
    %vm64 = vcmp.eq.s32.totalorder %v27, %v41
    %vm65 = vcmp.eq.s32.totalorder %v27, %v45
    %vm66 = vcmp.eq.s32.totalorder %v28, %v33
    %vm67 = vcmp.eq.s32.totalorder %v28, %v37
    %vm68 = vcmp.eq.s32.totalorder %v28, %v41
    %vm69 = vcmp.eq.s32.totalorder %v28, %v45
    %vm70 = vcmp.eq.s32.totalorder %v29, %v33
    %vm71 = vcmp.eq.s32.totalorder %v29, %v37
    %vm72 = vcmp.eq.s32.totalorder %v29, %v41
    %vm73 = vcmp.eq.s32.totalorder %v29, %v45
    %v74 = vsel %vm46, 1, 0
    %v75 = vsel %vm47, 1, 0
    %v76 = vsel %vm48, 1, 0
    %v77 = vsel %vm49, 1, 0
    %v78 = vsel %vm50, 1, 0
    %v79 = vsel %vm51, 1, 0
    %v80 = vsel %vm52, 1, 0
    %v81 = vsel %vm53, 1, 0
    %v82 = vsel %vm54, 1, 0
    %v83 = vsel %vm55, 1, 0
    %v84 = vsel %vm56, 1, 0
    %v85 = vsel %vm57, 1, 0
    %v86 = vsel %vm58, 1, 0
    %v87 = vsel %vm59, 1, 0
    %v88 = vsel %vm60, 1, 0
    %v89 = vsel %vm61, 1, 0
    %v90 = vsel %vm62, 1, 0
    %v91 = vsel %vm63, 1, 0
    %v92 = vsel %vm64, 1, 0
    %v93 = vsel %vm65, 1, 0
    %v94 = vsel %vm66, 1, 0
    %v95 = vsel %vm67, 1, 0
    %v96 = vsel %vm68, 1, 0
    %v97 = vsel %vm69, 1, 0
    %v98 = vsel %vm70, 1, 0
    %v99 = vsel %vm71, 1, 0
    %v100 = vsel %vm72, 1, 0
    %v101 = vsel %vm73, 1, 0
    %v102 = vcvt.s32.f32 %v74
    %v103 = vcvt.s32.f32 %v75
    %v104 = vcvt.s32.f32 %v76
    %v105 = vcvt.s32.f32 %v77
    %v106 = vcvt.s32.f32 %v78
    %v107 = vcvt.s32.f32 %v79
    %v108 = vcvt.s32.f32 %v80
    %v109 = vcvt.s32.f32 %v81
    %v110 = vcvt.s32.f32 %v82
    %v111 = vcvt.s32.f32 %v83
    %v112 = vcvt.s32.f32 %v84
    %v113 = vcvt.s32.f32 %v85
    %v114 = vcvt.s32.f32 %v86
    %v115 = vcvt.s32.f32 %v87
    %v116 = vcvt.s32.f32 %v88
    %v117 = vcvt.s32.f32 %v89
    %v118 = vcvt.s32.f32 %v90
    %v119 = vcvt.s32.f32 %v91
    %v120 = vcvt.s32.f32 %v92
    %v121 = vcvt.s32.f32 %v93
    %v122 = vcvt.s32.f32 %v94
    %v123 = vcvt.s32.f32 %v95
    %v124 = vcvt.s32.f32 %v96
    %v125 = vcvt.s32.f32 %v97
    %v126 = vcvt.s32.f32 %v98
    %v127 = vcvt.s32.f32 %v99
    %v128 = vcvt.s32.f32 %v100
    %v129 = vcvt.s32.f32 %v101
    %v130 = vlaneseq
    %v131 = vshrl.u32 %v130, 7
    %v132 = vsub.s32 0, %v131
    %v133 = vrot.slane %v21, %v132
    %v134 = vlaneseq
    %v135 = vshrl.u32 %v134, 7
    %v136 = vsub.s32 1, %v135
    %v137 = vrot.slane %v21, %v136
    %v138 = vlaneseq
    %v139 = vshrl.u32 %v138, 7
    %v140 = vsub.s32 2, %v139
    %v141 = vrot.slane %v21, %v140
    %v142 = vlaneseq
    %v143 = vshrl.u32 %v142, 7
    %v144 = vsub.s32 3, %v143
    %v145 = vrot.slane %v21, %v144
    %vm146 = vcmp.eq.s32.totalorder %v23, %v133
    %vm147 = vcmp.eq.s32.totalorder %v23, %v137
    %vm148 = vcmp.eq.s32.totalorder %v23, %v141
    %vm149 = vcmp.eq.s32.totalorder %v23, %v145
    %vm150 = vcmp.eq.s32.totalorder %v24, %v133
    %vm151 = vcmp.eq.s32.totalorder %v24, %v137
    %vm152 = vcmp.eq.s32.totalorder %v24, %v141
    %vm153 = vcmp.eq.s32.totalorder %v24, %v145
    %vm154 = vcmp.eq.s32.totalorder %v25, %v133
    %vm155 = vcmp.eq.s32.totalorder %v25, %v137
    %vm156 = vcmp.eq.s32.totalorder %v25, %v141
    %vm157 = vcmp.eq.s32.totalorder %v25, %v145
    %vm158 = vcmp.eq.s32.totalorder %v26, %v133
    %vm159 = vcmp.eq.s32.totalorder %v26, %v137
    %vm160 = vcmp.eq.s32.totalorder %v26, %v141
    %vm161 = vcmp.eq.s32.totalorder %v26, %v145
    %vm162 = vcmp.eq.s32.totalorder %v27, %v133
    %vm163 = vcmp.eq.s32.totalorder %v27, %v137
    %vm164 = vcmp.eq.s32.totalorder %v27, %v141
    %vm165 = vcmp.eq.s32.totalorder %v27, %v145
    %v166 = vsel %vm146, 1, 0
    %v167 = vsel %vm147, 1, 0
    %v168 = vsel %vm148, 1, 0
    %v169 = vsel %vm149, 1, 0
    %v170 = vsel %vm150, 1, 0
    %v171 = vsel %vm151, 1, 0
    %v172 = vsel %vm152, 1, 0
    %v173 = vsel %vm153, 1, 0
    %v174 = vsel %vm154, 1, 0
    %v175 = vsel %vm155, 1, 0
    %v176 = vsel %vm156, 1, 0
    %v177 = vsel %vm157, 1, 0
    %v178 = vsel %vm158, 1, 0
    %v179 = vsel %vm159, 1, 0
    %v180 = vsel %vm160, 1, 0
    %v181 = vsel %vm161, 1, 0
    %v182 = vsel %vm162, 1, 0
    %v183 = vsel %vm163, 1, 0
    %v184 = vsel %vm164, 1, 0
    %v185 = vsel %vm165, 1, 0
    %v186 = vcvt.s32.f32 %v166
    %v187 = vcvt.s32.f32 %v167
    %v188 = vcvt.s32.f32 %v168
    %v189 = vcvt.s32.f32 %v169
    %v190 = vcvt.s32.f32 %v170
    %v191 = vcvt.s32.f32 %v171
    %v192 = vcvt.s32.f32 %v172
    %v193 = vcvt.s32.f32 %v173
    %v194 = vcvt.s32.f32 %v174
    %v195 = vcvt.s32.f32 %v175
    %v196 = vcvt.s32.f32 %v176
    %v197 = vcvt.s32.f32 %v177
    %v198 = vcvt.s32.f32 %v178
    %v199 = vcvt.s32.f32 %v179
    %v200 = vcvt.s32.f32 %v180
    %v201 = vcvt.s32.f32 %v181
    %v202 = vcvt.s32.f32 %v182
    %v203 = vcvt.s32.f32 %v183
    %v204 = vcvt.s32.f32 %v184
    %v205 = vcvt.s32.f32 %v185
    %vm206 = vcmask 408576
    %v208 = vsel %vm206, %v18, 0
    %vm210 = vcmask 1041408
    %v212 = vsel %vm210, %v126, 0
    %v215 = vsel %vm210, %v127, 0
    %v218 = vsel %vm210, %v128, 0
    %v221 = vsel %vm210, %v129, 0
    %223 = vmatprep.subr.mxu0 %v103
    %224 = vmatpush1.msra.mxu0 %v102
    %225 = vmatprep.subr.mxu0 %v107
    %226 = vmatpush1.msra.mxu0 %v106
    %227 = vmatprep.subr.mxu0 %v111
    %228 = vmatpush1.msra.mxu0 %v110
    %229 = vmatprep.subr.mxu0 %v115
    %230 = vmatpush1.msra.mxu0 %v114
    %231 = vmatprep.subr.mxu0 %v119
    %232 = vmatpush1.msra.mxu0 %v118
    %233 = vmatprep.subr.mxu0 %v123
    %234 = vmatpush1.msra.mxu0 %v122
    %235 = vmatprep.subr.mxu0 %v215
    %236 = vmatpush1.msra.mxu0 %v212
    %237 = vmatprep.subr.mxu0 0.0
    %238 = vmatpush1.msra.mxu0 0.0
    %239 = vmatprep.subr.mxu0 0.0
    %240 = vmatpush1.msra.mxu0 0.0
    %241 = vmatprep.subr.mxu0 0.0
    %242 = vmatpush1.msra.mxu0 0.0
    %243 = vmatprep.subr.mxu0 0.0
    %244 = vmatpush1.msra.mxu0 0.0
    %245 = vmatprep.subr.mxu0 0.0
    %246 = vmatpush1.msra.mxu0 0.0
    %247 = vmatprep.subr.mxu0 0.0
    %248 = vmatpush1.msra.mxu0 0.0
    %249 = vmatprep.subr.mxu0 0.0
    %250 = vmatpush1.msra.mxu0 0.0
    %251 = vmatprep.subr.mxu0 0.0
    %252 = vmatpush1.msra.mxu0 0.0
    %253 = vmatprep.subr.mxu0 0.0
    %254 = vmatpush1.msra.mxu0 0.0
    %255 = vmatprep.subr.mxu0 0.0
    %256 = vmatpush1.msra.mxu0 0.0
    %257 = vmatprep.subr.mxu0 0.0
    %258 = vmatpush1.msra.mxu0 0.0
    %259 = vmatprep.subr.mxu0 0.0
    %260 = vmatpush1.msra.mxu0 0.0
    %261 = vmatprep.subr.mxu0 0.0
    %262 = vmatpush1.msra.mxu0 0.0
    %263 = vmatprep.subr.mxu0 0.0
    %264 = vmatpush1.msra.mxu0 0.0
    %265 = vmatprep.subr.mxu0 0.0
    %266 = vmatpush1.msra.mxu0 0.0
    %267 = vmatprep.subr.mxu0 0.0
    %268 = vmatpush1.msra.mxu0 0.0
    %269 = vmatprep.subr.mxu0 0.0
    %270 = vmatpush1.msra.mxu0 0.0
    %271 = vmatprep.subr.mxu0 0.0
    %272 = vmatpush1.msra.mxu0 0.0
    %273 = vmatprep.subr.mxu0 0.0
    %274 = vmatpush1.msra.mxu0 0.0
    %275 = vmatprep.subr.mxu0 0.0
    %276 = vmatpush1.msra.mxu0 0.0
    %277 = vmatprep.subr.mxu0 0.0
    %278 = vmatpush1.msra.mxu0 0.0
    %279 = vmatprep.subr.mxu0 0.0
    %280 = vmatpush1.msra.mxu0 0.0
    %281 = vmatprep.subr.mxu0 0.0
    %282 = vmatpush1.msra.mxu0 0.0
    %283 = vmatprep.subr.mxu0 0.0
    %284 = vmatpush1.msra.mxu0 0.0
    %285 = vmatprep.subr.mxu0 0.0
    %286 = vmatpush1.msra.mxu0 0.0
    %287 = vmatprep.mubr.f32.mxu0 0.0
    %288 = vmatmul.mubr.f32.gmra.mrb[0].mxu0 %v208
    %v289 = vpop.f32.mrb[0].mxu0
    %v290 = vadd.f32 0.0, %v289
    %v291 = vpop.f32.mrb[0].mxu0
    %v292 = vadd.f32 0.0, %v291
    %293 = vdwg.mxu0
    %294 = vmatprep.subr.mxu0 %v105
    %295 = vmatpush1.msra.mxu0 %v104
    %296 = vmatprep.subr.mxu0 %v109
    %297 = vmatpush1.msra.mxu0 %v108
    %298 = vmatprep.subr.mxu0 %v113
    %299 = vmatpush1.msra.mxu0 %v112
    %300 = vmatprep.subr.mxu0 %v117
    %301 = vmatpush1.msra.mxu0 %v116
    %302 = vmatprep.subr.mxu0 %v121
    %303 = vmatpush1.msra.mxu0 %v120
    %304 = vmatprep.subr.mxu0 %v125
    %305 = vmatpush1.msra.mxu0 %v124
    %306 = vmatprep.subr.mxu0 %v221
    %307 = vmatpush1.msra.mxu0 %v218
    %308 = vmatprep.subr.mxu0 0.0
    %309 = vmatpush1.msra.mxu0 0.0
    %310 = vmatprep.subr.mxu0 0.0
    %311 = vmatpush1.msra.mxu0 0.0
    %312 = vmatprep.subr.mxu0 0.0
    %313 = vmatpush1.msra.mxu0 0.0
    %314 = vmatprep.subr.mxu0 0.0
    %315 = vmatpush1.msra.mxu0 0.0
    %316 = vmatprep.subr.mxu0 0.0
    %317 = vmatpush1.msra.mxu0 0.0
    %318 = vmatprep.subr.mxu0 0.0
    %319 = vmatpush1.msra.mxu0 0.0
    %320 = vmatprep.subr.mxu0 0.0
    %321 = vmatpush1.msra.mxu0 0.0
    %322 = vmatprep.subr.mxu0 0.0
    %323 = vmatpush1.msra.mxu0 0.0
    %324 = vmatprep.subr.mxu0 0.0
    %325 = vmatpush1.msra.mxu0 0.0
    %326 = vmatprep.subr.mxu0 0.0
    %327 = vmatpush1.msra.mxu0 0.0
    %328 = vmatprep.subr.mxu0 0.0
    %329 = vmatpush1.msra.mxu0 0.0
    %330 = vmatprep.subr.mxu0 0.0
    %331 = vmatpush1.msra.mxu0 0.0
    %332 = vmatprep.subr.mxu0 0.0
    %333 = vmatpush1.msra.mxu0 0.0
    %334 = vmatprep.subr.mxu0 0.0
    %335 = vmatpush1.msra.mxu0 0.0
    %336 = vmatprep.subr.mxu0 0.0
    %337 = vmatpush1.msra.mxu0 0.0
    %338 = vmatprep.subr.mxu0 0.0
    %339 = vmatpush1.msra.mxu0 0.0
    %340 = vmatprep.subr.mxu0 0.0
    %341 = vmatpush1.msra.mxu0 0.0
    %342 = vmatprep.subr.mxu0 0.0
    %343 = vmatpush1.msra.mxu0 0.0
    %344 = vmatprep.subr.mxu0 0.0
    %345 = vmatpush1.msra.mxu0 0.0
    %346 = vmatprep.subr.mxu0 0.0
    %347 = vmatpush1.msra.mxu0 0.0
    %348 = vmatprep.subr.mxu0 0.0
    %349 = vmatpush1.msra.mxu0 0.0
    %350 = vmatprep.subr.mxu0 0.0
    %351 = vmatpush1.msra.mxu0 0.0
    %352 = vmatprep.subr.mxu0 0.0
    %353 = vmatpush1.msra.mxu0 0.0
    %354 = vmatprep.subr.mxu0 0.0
    %355 = vmatpush1.msra.mxu0 0.0
    %356 = vmatprep.subr.mxu0 0.0
    %357 = vmatpush1.msra.mxu0 0.0
    %358 = vmatprep.mubr.f32.mxu0 0.0
    %359 = vmatmul.mubr.f32.gmra.mrb[0].mxu0 %v208
    %v360 = vpop.f32.mrb[0].mxu0
    %v361 = vadd.f32 0.0, %v360
    %v362 = vpop.f32.mrb[0].mxu0
    %v363 = vadd.f32 0.0, %v362
    %364 = vdwg.mxu0
    %vm365 = vcmask 326656
    %v367 = vsel %vm365, %v19, 0
    %369 = vmatprep.subr.mxu0 %v187
    %370 = vmatpush1.msra.mxu0 %v186
    %371 = vmatprep.subr.mxu0 %v191
    %372 = vmatpush1.msra.mxu0 %v190
    %373 = vmatprep.subr.mxu0 %v195
    %374 = vmatpush1.msra.mxu0 %v194
    %375 = vmatprep.subr.mxu0 %v199
    %376 = vmatpush1.msra.mxu0 %v198
    %377 = vmatprep.subr.mxu0 %v203
    %378 = vmatpush1.msra.mxu0 %v202
    %379 = vmatprep.subr.mxu0 0.0
    %380 = vmatpush1.msra.mxu0 0.0
    %381 = vmatprep.subr.mxu0 0.0
    %382 = vmatpush1.msra.mxu0 0.0
    %383 = vmatprep.subr.mxu0 0.0
    %384 = vmatpush1.msra.mxu0 0.0
    %385 = vmatprep.subr.mxu0 0.0
    %386 = vmatpush1.msra.mxu0 0.0
    %387 = vmatprep.subr.mxu0 0.0
    %388 = vmatpush1.msra.mxu0 0.0
    %389 = vmatprep.subr.mxu0 0.0
    %390 = vmatpush1.msra.mxu0 0.0
    %391 = vmatprep.subr.mxu0 0.0
    %392 = vmatpush1.msra.mxu0 0.0
    %393 = vmatprep.subr.mxu0 0.0
    %394 = vmatpush1.msra.mxu0 0.0
    %395 = vmatprep.subr.mxu0 0.0
    %396 = vmatpush1.msra.mxu0 0.0
    %397 = vmatprep.subr.mxu0 0.0
    %398 = vmatpush1.msra.mxu0 0.0
    %399 = vmatprep.subr.mxu0 0.0
    %400 = vmatpush1.msra.mxu0 0.0
    %401 = vmatprep.subr.mxu0 0.0
    %402 = vmatpush1.msra.mxu0 0.0
    %403 = vmatprep.subr.mxu0 0.0
    %404 = vmatpush1.msra.mxu0 0.0
    %405 = vmatprep.subr.mxu0 0.0
    %406 = vmatpush1.msra.mxu0 0.0
    %407 = vmatprep.subr.mxu0 0.0
    %408 = vmatpush1.msra.mxu0 0.0
    %409 = vmatprep.subr.mxu0 0.0
    %410 = vmatpush1.msra.mxu0 0.0
    %411 = vmatprep.subr.mxu0 0.0
    %412 = vmatpush1.msra.mxu0 0.0
    %413 = vmatprep.subr.mxu0 0.0
    %414 = vmatpush1.msra.mxu0 0.0
    %415 = vmatprep.subr.mxu0 0.0
    %416 = vmatpush1.msra.mxu0 0.0
    %417 = vmatprep.subr.mxu0 0.0
    %418 = vmatpush1.msra.mxu0 0.0
    %419 = vmatprep.subr.mxu0 0.0
    %420 = vmatpush1.msra.mxu0 0.0
    %421 = vmatprep.subr.mxu0 0.0
    %422 = vmatpush1.msra.mxu0 0.0
    %423 = vmatprep.subr.mxu0 0.0
    %424 = vmatpush1.msra.mxu0 0.0
    %425 = vmatprep.subr.mxu0 0.0
    %426 = vmatpush1.msra.mxu0 0.0
    %427 = vmatprep.subr.mxu0 0.0
    %428 = vmatpush1.msra.mxu0 0.0
    %429 = vmatprep.subr.mxu0 0.0
    %430 = vmatpush1.msra.mxu0 0.0
    %431 = vmatprep.subr.mxu0 0.0
    %432 = vmatpush1.msra.mxu0 0.0
    %433 = vmatprep.mubr.f32.mxu0 0.0
    %434 = vmatmul.mubr.f32.gmra.mrb[0].mxu0 %v367
    %v435 = vpop.f32.mrb[0].mxu0
    %v436 = vadd.f32 0.0, %v435
    %v437 = vpop.f32.mrb[0].mxu0
    %v438 = vadd.f32 0.0, %v437
    %439 = vdwg.mxu0
    %440 = vmatprep.subr.mxu0 %v189
    %441 = vmatpush1.msra.mxu0 %v188
    %442 = vmatprep.subr.mxu0 %v193
    %443 = vmatpush1.msra.mxu0 %v192
    %444 = vmatprep.subr.mxu0 %v197
    %445 = vmatpush1.msra.mxu0 %v196
    %446 = vmatprep.subr.mxu0 %v201
    %447 = vmatpush1.msra.mxu0 %v200
    %448 = vmatprep.subr.mxu0 %v205
    %449 = vmatpush1.msra.mxu0 %v204
    %450 = vmatprep.subr.mxu0 0.0
    %451 = vmatpush1.msra.mxu0 0.0
    %452 = vmatprep.subr.mxu0 0.0
    %453 = vmatpush1.msra.mxu0 0.0
    %454 = vmatprep.subr.mxu0 0.0
    %455 = vmatpush1.msra.mxu0 0.0
    %456 = vmatprep.subr.mxu0 0.0
    %457 = vmatpush1.msra.mxu0 0.0
    %458 = vmatprep.subr.mxu0 0.0
    %459 = vmatpush1.msra.mxu0 0.0
    %460 = vmatprep.subr.mxu0 0.0
    %461 = vmatpush1.msra.mxu0 0.0
    %462 = vmatprep.subr.mxu0 0.0
    %463 = vmatpush1.msra.mxu0 0.0
    %464 = vmatprep.subr.mxu0 0.0
    %465 = vmatpush1.msra.mxu0 0.0
    %466 = vmatprep.subr.mxu0 0.0
    %467 = vmatpush1.msra.mxu0 0.0
    %468 = vmatprep.subr.mxu0 0.0
    %469 = vmatpush1.msra.mxu0 0.0
    %470 = vmatprep.subr.mxu0 0.0
    %471 = vmatpush1.msra.mxu0 0.0
    %472 = vmatprep.subr.mxu0 0.0
    %473 = vmatpush1.msra.mxu0 0.0
    %474 = vmatprep.subr.mxu0 0.0
    %475 = vmatpush1.msra.mxu0 0.0
    %476 = vmatprep.subr.mxu0 0.0
    %477 = vmatpush1.msra.mxu0 0.0
    %478 = vmatprep.subr.mxu0 0.0
    %479 = vmatpush1.msra.mxu0 0.0
    %480 = vmatprep.subr.mxu0 0.0
    %481 = vmatpush1.msra.mxu0 0.0
    %482 = vmatprep.subr.mxu0 0.0
    %483 = vmatpush1.msra.mxu0 0.0
    %484 = vmatprep.subr.mxu0 0.0
    %485 = vmatpush1.msra.mxu0 0.0
    %486 = vmatprep.subr.mxu0 0.0
    %487 = vmatpush1.msra.mxu0 0.0
    %488 = vmatprep.subr.mxu0 0.0
    %489 = vmatpush1.msra.mxu0 0.0
    %490 = vmatprep.subr.mxu0 0.0
    %491 = vmatpush1.msra.mxu0 0.0
    %492 = vmatprep.subr.mxu0 0.0
    %493 = vmatpush1.msra.mxu0 0.0
    %494 = vmatprep.subr.mxu0 0.0
    %495 = vmatpush1.msra.mxu0 0.0
    %496 = vmatprep.subr.mxu0 0.0
    %497 = vmatpush1.msra.mxu0 0.0
    %498 = vmatprep.subr.mxu0 0.0
    %499 = vmatpush1.msra.mxu0 0.0
    %500 = vmatprep.subr.mxu0 0.0
    %501 = vmatpush1.msra.mxu0 0.0
    %502 = vmatprep.subr.mxu0 0.0
    %503 = vmatpush1.msra.mxu0 0.0
    %504 = vmatprep.mubr.f32.mxu0 0.0
    %505 = vmatmul.mubr.f32.gmra.mrb[0].mxu0 %v367
    %v506 = vpop.f32.mrb[0].mxu0
    %v507 = vadd.f32 0.0, %v506
    %v508 = vpop.f32.mrb[0].mxu0
    %v509 = vadd.f32 0.0, %v508
    %510 = vdwg.mxu0
    %v511 = vmul.f32 %v290, %v436
    %v512 = vmul.f32 %v292, %v438
    %v513 = vmul.f32 %v361, %v507
    %v514 = vmul.f32 %v363, %v509
    %v515 = vadd.f32 %v511, %v513
    %v516 = vadd.f32 %v512, %v514
    %vm517 = vcmask 1044480
    %v518 = vsel %vm517, %v515, 0.0
    %v519 = vrot.slane %v518, 4
    %v520 = vadd.f32 %v518, %v519
    %v521 = vrot.slane %v520, 2
    %v522 = vadd.f32 %v520, %v521
    %v523 = vrot.slane %v522, 1
    %v524 = vadd.f32 %v522, %v523
    %v525 = vsel %vm517, %v516, 0.0
    %v526 = vrot.slane %v525, 4
    %v527 = vadd.f32 %v525, %v526
    %v528 = vrot.slane %v527, 2
    %v529 = vadd.f32 %v527, %v528
    %v530 = vrot.slane %v529, 1
    %v531 = vadd.f32 %v529, %v530
    %v534 = vcombine.low %v524, %v531
    %v536 = vunpack.c.l.s4 1966171168
    %v537 = vunpack.c.0.s8 %v536
    %v538 = vlaneseq
    %v539 = vshrl.u32 %v538, 7
    %v540 = vsub.s32 %v537, %v539
    %v541 = vrot.slane %v534, %v540
    %v543 = vunpack.c.l.s4 1966171168
    %v544 = vunpack.c.0.s8 %v543
    %v545 = vlaneseq
    %v546 = vshrl.u32 %v545, 7
    %v547 = vsub.s32 %v544, %v546
    %v548 = vrot.slane %v541, %v547
    %v550 = vlaneseq
    %vm551 = vcmp.ge.s32.totalorder %v550, 0
    %vm552 = vcmp.lt.s32.totalorder %v550, 256
    %vm553 = vmand %vm551, %vm552
    %554 = vst.msk [vmem:[#allocation2] sm:$0x3] %vm553, %v548
    // Predicated region
    $region18: #{_mf_forward_impl.1} parent=1 // pred_check
      _
    $region19: #{_mf_forward_impl.1} parent=1 // pred_check_branch
      %556 = sbr.rel (0) target = $region21
    $region20: #{_mf_forward_impl.1} parent=1 // pred_region
      %s558 = ssub.s32 32, 32
      %559 = vsyncadd [#allocation3], %s558
      %s561 = sshll.u32 [#allocation2], 4
      %s562 = int_to_ptr.vmem [resolvable:$true] %s561
      %564 = dma.vmem_to_hbm [thread:$0]  %s562, 32, %s4, [#allocation3]
    $region21: #{_mf_forward_impl.1} parent=1 // pred_fallthru
      _
    // Predicated region
    $region22: #{_mf_forward_impl.1} parent=1 // pred_check
      _
    $region23: #{_mf_forward_impl.1} parent=1 // pred_check_branch
      %566 = sbr.rel (0) target = $region25
    $region24: #{_mf_forward_impl.1} parent=1 // pred_region
      %567 = dma.done [#allocation3], 32
    $region25: #{_mf_forward_impl.1} parent=1 // pred_fallthru
      _
    %568 = vsyncpa [#allocation3], 1

</llo_original>
